<compile_context>
chip_gen: v7x
topology: tpu7x:2x2x1
jax: 0.10.0
libtpu: 0.0.40
codegen_flags: <defaults>
</compile_context>

<pallas_src>
import jax
import jax.numpy as jnp
from jax import lax
from jax.experimental import pallas as pl
from jax.experimental.pallas import tpu as pltpu


# ----------------------------------------------------------------------------
# Pallas kernel: one grid step = one batch element x one lane tile (all levels
# fused into the flat lane axis).
# ----------------------------------------------------------------------------
def _gen_targets_kernel(loc_ref, gt_ref, cls_out_ref, cnt_out_ref, reg_out_ref):
    # Per-location data for this lane tile: (1, TN) rows of an aligned (8, TN).
    x = loc_ref[0:1, :]          # orig-image x coord
    y = loc_ref[1:2, :]          # orig-image y coord
    radiu = loc_ref[2:3, :]      # stride * 1.5 for this location's level
    lim_lo = loc_ref[3:4, :]     # level limit_range[0]
    lim_hi = loc_ref[4:5, :]     # level limit_range[1]

    # Per-box table for this batch element: (m_pad, 8) f32.
    gt = gt_ref[0]
    x0, y0 = gt[:, 0:1], gt[:, 1:2]
    x1, y1 = gt[:, 2:3], gt[:, 3:4]
    cx, cy = gt[:, 4:5], gt[:, 5:6]
    rank_i = gt[:, 6:7].astype(jnp.int32)      # area rank (ties by box index)
    cls_i = gt[:, 7:8].astype(jnp.int32)       # class id (assumed in [0,65535])
    key = rank_i * 65536 + cls_i               # packed selection key, (m_pad,1)

    # ltrb offsets of every location to every gt box: (m_pad, TN)
    l_off = x - x0
    t_off = y - y0
    r_off = x1 - x
    b_off = y1 - y

    off_min = jnp.minimum(jnp.minimum(l_off, t_off), jnp.minimum(r_off, b_off))
    off_max = jnp.maximum(jnp.maximum(l_off, t_off), jnp.maximum(r_off, b_off))

    mask_in_gtboxes = off_min > 0.0
    mask_in_level = (off_max > lim_lo) & (off_max <= lim_hi)
    # Center-sampling test: max of the 4 center offsets == max(|x-cx|, |y-cy|).
    c_off_max = jnp.maximum(jnp.abs(x - cx), jnp.abs(y - cy))
    mask_center = c_off_max < radiu

    mask_pos = mask_in_gtboxes & mask_in_level & mask_center    # (m_pad, TN)

    # Single sublane min over the packed key gives: selected box (via its
    # rank), its class, and whether any positive box exists for this lane.
    big = jnp.int32(2**31 - 1)
    key_masked = jnp.where(mask_pos, key, big)                  # (m_pad, TN)
    min_key = jnp.min(key_masked, axis=0, keepdims=True)        # (1, TN)
    mask_pos_2 = min_key < big                                  # any positive

    rank_sel = min_key >> 16                                    # (1, TN)
    cls_sel = jnp.bitwise_and(min_key, 0xFFFF)                  # (1, TN)

    # Gather ltrb offsets of the selected (min-area) box.
    onehot_f = (rank_i == rank_sel).astype(jnp.float32)         # (m_pad, TN)
    reg_l = jnp.sum(l_off * onehot_f, axis=0, keepdims=True)    # (1, TN)
    reg_t = jnp.sum(t_off * onehot_f, axis=0, keepdims=True)
    reg_r = jnp.sum(r_off * onehot_f, axis=0, keepdims=True)
    reg_b = jnp.sum(b_off * onehot_f, axis=0, keepdims=True)

    lr_min = jnp.minimum(reg_l, reg_r)
    lr_max = jnp.maximum(reg_l, reg_r)
    tb_min = jnp.minimum(reg_t, reg_b)
    tb_max = jnp.maximum(reg_t, reg_b)
    # Clamp numerator AND denominator: on positive lanes all offsets are > 0
    # so this is a no-op; on masked lanes it prevents any transient NaN.
    num = jnp.maximum(lr_min * tb_min, 0.0)
    den = jnp.maximum(lr_max * tb_max, 0.0) + 1e-10
    cnt = jnp.sqrt(num / den)                                   # (1, TN)

    neg1 = jnp.float32(-1.0)
    cls_out_ref[...] = jnp.where(mask_pos_2, cls_sel, 0)[None]
    cnt_out_ref[...] = jnp.where(mask_pos_2, cnt, neg1)[None]
    # Store reg rows directly into the lane-dense (1, 4, TN) block.
    reg_out_ref[0, 0:1, :] = jnp.where(mask_pos_2, reg_l, neg1)
    reg_out_ref[0, 1:2, :] = jnp.where(mask_pos_2, reg_t, neg1)
    reg_out_ref[0, 2:3, :] = jnp.where(mask_pos_2, reg_r, neg1)
    reg_out_ref[0, 3:4, :] = jnp.where(mask_pos_2, reg_b, neg1)


# ----------------------------------------------------------------------------
# Wrapper helpers.
# ----------------------------------------------------------------------------
def _vmem_capacity_bytes():
    """Physical VMEM of the current TPU generation (conservative fallback)."""
    try:
        return int(pltpu.get_tpu_info().vmem_capacity_bytes)
    except Exception:
        return 64 * 1024 * 1024          # v7x-sized fallback; safe everywhere


def _pick_tile_n(m_pad, n_total, batch, vmem_bytes):
    # ~16 live (m_pad, TN) f32 temporaries; budget them at ~1/8 of physical
    # VMEM (16 MiB on v5e/v6e, 8 MiB on v7x) so spilling never kicks in.
    budget = vmem_bytes // 8
    live_temps = 16
    tn = budget // (live_temps * m_pad * 4)
    tn = (tn // 128) * 128
    tn = max(128, min(8192, tn))
    # Never pad far beyond the actual number of locations.
    tn = min(tn, max(128, -(-n_total // 128) * 128))
    # v7x has 2 TensorCores: with a single image keep >= 2 parallel steps.
    if batch == 1 and n_total > 128:
        half = (((n_total + 1) // 2) + 127) // 128 * 128
        tn = min(tn, max(128, half))
    return int(tn)


# ----------------------------------------------------------------------------
# Wrapper: build fused per-location / per-box tables, pad, call kernel once.
# ----------------------------------------------------------------------------
def gen_targets_fused(feature_shapes, strides, limit_range, gt_boxes, classes):
    """feature_shapes: list of (h, w) per level (from NCHW feature maps)."""
    B, m, _ = gt_boxes.shape

    # Per-location tables (coords_fmap2orig fused over all levels).
    xs_l, ys_l, rd_l, lo_l, hi_l = [], [], [], [], []
    for (h, w), s, (lo, hi) in zip(feature_shapes, strides, limit_range):
        shifts_x = jnp.arange(0, w * s, s, dtype=jnp.float32)
        shifts_y = jnp.arange(0, h * s, s, dtype=jnp.float32)
        sy, sx = jnp.meshgrid(shifts_y, shifts_x, indexing="ij")
        n = h * w
        xs_l.append(sx.reshape(-1) + s // 2)
        ys_l.append(sy.reshape(-1) + s // 2)
        rd_l.append(jnp.full((n,), float(s) * 1.5, jnp.float32))
        lo_l.append(jnp.full((n,), float(lo), jnp.float32))
        hi_l.append(jnp.full((n,), float(hi), jnp.float32))
    xs = jnp.concatenate(xs_l)
    ys = jnp.concatenate(ys_l)
    rd = jnp.concatenate(rd_l)
    lo = jnp.concatenate(lo_l)
    hi = jnp.concatenate(hi_l)
    n_total = int(xs.shape[0])

    # Pad boxes up to a multiple of 8 sublanes; pad boxes are degenerate so
    # mask_in_gtboxes is always false for them.
    m_pad = -(-m // 8) * 8
    gt_f = gt_boxes.astype(jnp.float32)
    cls_f = classes.astype(jnp.float32)
    if m_pad != m:
        pad_box = jnp.tile(jnp.array([[[1e8, 1e8, -1e8, -1e8]]], jnp.float32),
                           (B, m_pad - m, 1))
        gt_f = jnp.concatenate([gt_f, pad_box], axis=1)
        cls_f = jnp.concatenate(
            [cls_f, jnp.zeros((B, m_pad - m), jnp.float32)], axis=1)

    # Per-box selection rank: stable argsort of box area (ties by box index),
    # matching torch.min's first-index tie-break.
    # NOTE: area uses the hoisted (x1-x0)*(y1-y0); algebraically identical to
    # the reference's (l+r)*(t+b) -- only ulp-level equal-area ties can differ.
    area = (gt_f[..., 2] - gt_f[..., 0]) * (gt_f[..., 3] - gt_f[..., 1])
    order = jnp.argsort(area, axis=1, stable=True)
    rank = jnp.argsort(order, axis=1, stable=True).astype(jnp.float32)
    cx = (gt_f[..., 0] + gt_f[..., 2]) * 0.5
    cy = (gt_f[..., 1] + gt_f[..., 3]) * 0.5
    # Single merged per-box table (B, m_pad, 8): x0,y0,x1,y1,cx,cy,rank,class.
    gt_tab = jnp.stack([gt_f[..., 0], gt_f[..., 1], gt_f[..., 2], gt_f[..., 3],
                        cx, cy, rank, cls_f], axis=-1)

    # Tile / pad the lane axis (generation-aware tile size).
    vmem_bytes = _vmem_capacity_bytes()
    tn = _pick_tile_n(m_pad, n_total, B, vmem_bytes)
    num_tiles = -(-n_total // tn)
    n_pad = num_tiles * tn
    pad = n_pad - n_total

    def padn(a, v):
        return jnp.pad(a, (0, pad), constant_values=v) if pad else a

    zeros = jnp.zeros((n_pad,), jnp.float32)
    # Padding locations get limit_hi = -1 so every mask is false there.
    # 8 rows so the loc block is exactly an aligned (8, TN) tile.
    loc = jnp.stack([padn(xs, 0.0), padn(ys, 0.0), padn(rd, 0.0),
                     padn(lo, 0.0), padn(hi, -1.0),
                     zeros, zeros, zeros], axis=0)              # (8, n_pad)

    cost = pl.CostEstimate(
        flops=35 * m_pad * n_total * B,
        transcendentals=n_total * B,
        bytes_accessed=(B * 8 * n_pad * 4
                        + B * num_tiles * m_pad * 8 * 4
                        + B * 6 * n_pad * 4))
    vmem_limit = int(min(vmem_bytes // 2, 100 * 1024 * 1024))

    cls_t, cnt_t, reg_t = pl.pallas_call(
        _gen_targets_kernel,
        grid=(B, num_tiles),
        in_specs=[
            pl.BlockSpec((8, tn), lambda b, t: (0, t)),            # loc table
            pl.BlockSpec((1, m_pad, 8), lambda b, t: (b, 0, 0)),   # box table
        ],
        out_specs=[
            pl.BlockSpec((1, 1, tn), lambda b, t: (b, 0, t)),
            pl.BlockSpec((1, 1, tn), lambda b, t: (b, 0, t)),
            pl.BlockSpec((1, 4, tn), lambda b, t: (b, 0, t)),
        ],
        out_shape=[
            jax.ShapeDtypeStruct((B, 1, n_pad), jnp.int32),
            jax.ShapeDtypeStruct((B, 1, n_pad), jnp.float32),
            jax.ShapeDtypeStruct((B, 4, n_pad), jnp.float32),
        ],
        compiler_params=pltpu.CompilerParams(
            dimension_semantics=("parallel", "parallel"),
            vmem_limit_bytes=vmem_limit),
        cost_estimate=cost,
    )(loc, gt_tab)

    # Back to the torch-module output layout: [B, N, 1] / [B, N, 4].
    cls_out = cls_t[:, 0, :n_total].reshape(B, n_total, 1)
    cnt_out = cnt_t[:, 0, :n_total].reshape(B, n_total, 1)
    # Keep reg channel-major inside the kernel (lane-dense stores); one cheap
    # XLA transpose here does the [B, N, 4] relayout.
    reg_out = jnp.transpose(reg_t[:, :, :n_total], (0, 2, 1))
    return cls_out, cnt_out, reg_out


class GenTargets:
    """JAX/Pallas equivalent of the PyTorch GenTargets module (no weights)."""

    def __init__(self, strides, limit_range):
        assert len(strides) == len(limit_range)
        self.strides = strides
        self.limit_range = limit_range

    def __call__(self, inputs):
        (cls_logits, cnt_logits, reg_preds), gt_boxes, classes = inputs
        assert len(self.strides) == len(cls_logits)
        # NCHW feature maps are used only for their (h, w) shapes.
        shapes = [tuple(f.shape[2:]) for f in cls_logits]
        return gen_targets_fused(shapes, self.strides, self.limit_range,
                                 gt_boxes, classes)


# ----------------------------------------------------------------------------
# Pure-JAX reference (mirrors the torch code) for a correctness check.
# ----------------------------------------------------------------------------
def _ref_level_targets(gt_boxes, classes, h, w, stride, limit_range):
    B, m, _ = gt_boxes.shape
    shifts_x = jnp.arange(0, w * stride, stride, dtype=jnp.float32)
    shifts_y = jnp.arange(0, h * stride, stride, dtype=jnp.float32)
    sy, sx = jnp.meshgrid(shifts_y, shifts_x, indexing="ij")
    x = sx.reshape(-1) + stride // 2
    y = sy.reshape(-1) + stride // 2
    N = h * w
    gt = gt_boxes.astype(jnp.float32)
    l_off = x[None, :, None] - gt[..., 0][:, None, :]
    t_off = y[None, :, None] - gt[..., 1][:, None, :]
    r_off = gt[..., 2][:, None, :] - x[None, :, None]
    b_off = gt[..., 3][:, None, :] - y[None, :, None]
    ltrb = jnp.stack([l_off, t_off, r_off, b_off], -1)
    areas = jnp.broadcast_to(
        ((gt[..., 2] - gt[..., 0]) * (gt[..., 3] - gt[..., 1]))[:, None, :],
        l_off.shape)
    off_min = ltrb.min(-1)
    off_max = ltrb.max(-1)
    mask_in = off_min > 0
    mask_lv = (off_max > limit_range[0]) & (off_max <= limit_range[1])
    radiu = stride * 1.5
    cx = (gt[..., 0] + gt[..., 2]) / 2
    cy = (gt[..., 1] + gt[..., 3]) / 2
    c_ltrb = jnp.stack([x[None, :, None] - cx[:, None, :],
                        y[None, :, None] - cy[:, None, :],
                        cx[:, None, :] - x[None, :, None],
                        cy[:, None, :] - y[None, :, None]], -1)
    mask_c = c_ltrb.max(-1) < radiu
    mask_pos = mask_in & mask_lv & mask_c
    areas_m = jnp.where(mask_pos, areas, jnp.inf)
    idx = jnp.argmin(areas_m, axis=-1)                               # (B, N)
    reg_tgt = jnp.take_along_axis(ltrb, idx[..., None, None], axis=2)[:, :, 0, :]
    cls_bc = jnp.broadcast_to(classes[:, None, :].astype(jnp.int32), (B, N, m))
    cls_tgt = jnp.take_along_axis(cls_bc, idx[..., None], axis=2)
    lr_min = jnp.minimum(reg_tgt[..., 0], reg_tgt[..., 2])
    lr_max = jnp.maximum(reg_tgt[..., 0], reg_tgt[..., 2])
    tb_min = jnp.minimum(reg_tgt[..., 1], reg_tgt[..., 3])
    tb_max = jnp.maximum(reg_tgt[..., 1], reg_tgt[..., 3])
    cnt_tgt = jnp.sqrt(jnp.maximum(lr_min * tb_min, 0.0)
                       / (lr_max * tb_max + 1e-10))[..., None]
    pos2 = mask_pos.astype(jnp.int32).sum(-1) >= 1
    cls_tgt = jnp.where(pos2[..., None], cls_tgt, 0)
    cnt_tgt = jnp.where(pos2[..., None], cnt_tgt, -1.0)
    reg_tgt = jnp.where(pos2[..., None], reg_tgt, -1.0)
    return cls_tgt, cnt_tgt, reg_tgt


if __name__ == "__main__":
    key = jax.random.PRNGKey(0)
    B, class_num, m = 2, 4, 8
    strides = [8, 16, 32]
    limit_range = [[-1, 64], [64, 128], [128, 999999]]
    img = 128
    sizes = [(img // s, img // s) for s in strides]      # (16,16),(8,8),(4,4)

    k1, k2, k3, k4, k5 = jax.random.split(key, 5)
    # Feature maps (NCHW) — only their shapes are consumed by GenTargets.
    cls_logits = [jax.random.normal(k1, (B, class_num, h, w), jnp.float32)
                  for (h, w) in sizes]
    cnt_logits = [jax.random.normal(k2, (B, 1, h, w), jnp.float32)
                  for (h, w) in sizes]
    reg_preds = [jax.random.normal(k3, (B, 4, h, w), jnp.float32)
                 for (h, w) in sizes]

    # Ground-truth boxes (x0, y0, x1, y1) and class ids.
    xy0 = jax.random.uniform(k4, (B, m, 2), jnp.float32, 0.0, 80.0)
    wh = jax.random.uniform(k5, (B, m, 2), jnp.float32, 8.0, 48.0)
    gt_boxes = jnp.concatenate([xy0, xy0 + wh], axis=-1)
    classes = jax.random.randint(jax.random.PRNGKey(7), (B, m), 1,
                                 class_num + 1, dtype=jnp.int32)

    gen = GenTargets(strides, limit_range)
    cls_t, cnt_t, reg_t = gen([[cls_logits, cnt_logits, reg_preds],
                               gt_boxes, classes])
    jax.block_until_ready((cls_t, cnt_t, reg_t))

    total = sum(h * w for (h, w) in sizes)
    assert cls_t.shape == (B, total, 1) and cls_t.dtype == jnp.int32
    assert cnt_t.shape == (B, total, 1)
    assert reg_t.shape == (B, total, 4)

    # Correctness check against a pure-JAX reference of the torch semantics.
    ref_cls, ref_cnt, ref_reg = [], [], []
    for (h, w), s, lr in zip(sizes, strides, limit_range):
        c, n, r = _ref_level_targets(gt_boxes, classes, h, w, s, lr)
        ref_cls.append(c); ref_cnt.append(n); ref_reg.append(r)
    ref_cls = jnp.concatenate(ref_cls, 1)
    ref_cnt = jnp.concatenate(ref_cnt, 1)
    ref_reg = jnp.concatenate(ref_reg, 1)

    assert jnp.array_equal(cls_t, ref_cls)
    assert jnp.allclose(cnt_t, ref_cnt, atol=1e-5)
    assert jnp.allclose(reg_t, ref_reg, atol=1e-5)

    print("KERNEL_OK")
</pallas_src>

<mosaic_0001>
module attributes {stable_mosaic.version = 11 : i64} {
  func.func @_gen_targets_kernel(%arg0: i32, %arg1: i32, %arg2: memref<8x384xf32, #tpu.memory_space<vmem>>, %arg3: memref<1x8x8xf32, #tpu.memory_space<vmem>>, %arg4: memref<1x1x384xi32, #tpu.memory_space<vmem>>, %arg5: memref<1x1x384xf32, #tpu.memory_space<vmem>>, %arg6: memref<1x4x384xf32, #tpu.memory_space<vmem>>) attributes {dimension_semantics = [#tpu.dimension_semantics<parallel>, #tpu.dimension_semantics<parallel>], iteration_bounds = array<i64: 2, 1>, scalar_prefetch = 0 : i64, scratch_operands = 0 : i64, tpu.core_type = #tpu.core_type<tc>, window_params = [{transform_indices = @transform_0, window_bounds = array<i64: 8, 384>}, {transform_indices = @transform_1, window_bounds = array<i64: 1, 8, 8>}, {transform_indices = @transform_2, window_bounds = array<i64: 1, 1, 384>}, {transform_indices = @transform_3, window_bounds = array<i64: 1, 1, 384>}, {transform_indices = @transform_4, window_bounds = array<i64: 1, 4, 384>}]} {
    %c0 = arith.constant 0 : index
    %c0_0 = arith.constant 0 : index
    %0 = vector.load %arg2[%c0, %c0_0] : memref<8x384xf32, #tpu.memory_space<vmem>>, vector<1x384xf32>
    %c1 = arith.constant 1 : index
    %c0_1 = arith.constant 0 : index
    %1 = vector.load %arg2[%c1, %c0_1] : memref<8x384xf32, #tpu.memory_space<vmem>>, vector<1x384xf32>
    %c2 = arith.constant 2 : index
    %c0_2 = arith.constant 0 : index
    %2 = vector.load %arg2[%c2, %c0_2] : memref<8x384xf32, #tpu.memory_space<vmem>>, vector<1x384xf32>
    %c3 = arith.constant 3 : index
    %c0_3 = arith.constant 0 : index
    %3 = vector.load %arg2[%c3, %c0_3] : memref<8x384xf32, #tpu.memory_space<vmem>>, vector<1x384xf32>
    %c4 = arith.constant 4 : index
    %c0_4 = arith.constant 0 : index
    %4 = vector.load %arg2[%c4, %c0_4] : memref<8x384xf32, #tpu.memory_space<vmem>>, vector<1x384xf32>
    %c0_5 = arith.constant 0 : index
    %c0_6 = arith.constant 0 : index
    %c0_7 = arith.constant 0 : index
    %5 = vector.load %arg3[%c0_5, %c0_6, %c0_7] : memref<1x8x8xf32, #tpu.memory_space<vmem>>, vector<1x8x8xf32>
    %6 = vector.shape_cast %5 : vector<1x8x8xf32> to vector<8x8xf32>
    %7 = vector.extract_strided_slice %6 {offsets = [0, 0], sizes = [8, 1], strides = [1, 1]} : vector<8x8xf32> to vector<8x1xf32>
    %8 = vector.extract_strided_slice %6 {offsets = [0, 1], sizes = [8, 1], strides = [1, 1]} : vector<8x8xf32> to vector<8x1xf32>
    %9 = vector.extract_strided_slice %6 {offsets = [0, 2], sizes = [8, 1], strides = [1, 1]} : vector<8x8xf32> to vector<8x1xf32>
    %10 = vector.extract_strided_slice %6 {offsets = [0, 3], sizes = [8, 1], strides = [1, 1]} : vector<8x8xf32> to vector<8x1xf32>
    %11 = vector.extract_strided_slice %6 {offsets = [0, 4], sizes = [8, 1], strides = [1, 1]} : vector<8x8xf32> to vector<8x1xf32>
    %12 = vector.extract_strided_slice %6 {offsets = [0, 5], sizes = [8, 1], strides = [1, 1]} : vector<8x8xf32> to vector<8x1xf32>
    %13 = vector.extract_strided_slice %6 {offsets = [0, 6], sizes = [8, 1], strides = [1, 1]} : vector<8x8xf32> to vector<8x1xf32>
    %14 = arith.fptosi %13 : vector<8x1xf32> to vector<8x1xi32>
    %15 = vector.extract_strided_slice %6 {offsets = [0, 7], sizes = [8, 1], strides = [1, 1]} : vector<8x8xf32> to vector<8x1xf32>
    %16 = arith.fptosi %15 : vector<8x1xf32> to vector<8x1xi32>
    %c65536_i32 = arith.constant 65536 : i32
    %17 = vector.broadcast %c65536_i32 : i32 to vector<8x1xi32>
    %18 = arith.muli %14, %17 : vector<8x1xi32>
    %19 = arith.addi %18, %16 : vector<8x1xi32>
    %20 = vector.broadcast %0 : vector<1x384xf32> to vector<8x384xf32>
    %21 = vector.broadcast %7 : vector<8x1xf32> to vector<8x384xf32>
    %22 = arith.subf %20, %21 : vector<8x384xf32>
    %23 = vector.broadcast %1 : vector<1x384xf32> to vector<8x384xf32>
    %24 = vector.broadcast %8 : vector<8x1xf32> to vector<8x384xf32>
    %25 = arith.subf %23, %24 : vector<8x384xf32>
    %26 = vector.broadcast %9 : vector<8x1xf32> to vector<8x384xf32>
    %27 = vector.broadcast %0 : vector<1x384xf32> to vector<8x384xf32>
    %28 = arith.subf %26, %27 : vector<8x384xf32>
    %29 = vector.broadcast %10 : vector<8x1xf32> to vector<8x384xf32>
    %30 = vector.broadcast %1 : vector<1x384xf32> to vector<8x384xf32>
    %31 = arith.subf %29, %30 : vector<8x384xf32>
    %32 = arith.minimumf %22, %25 : vector<8x384xf32>
    %33 = arith.minimumf %28, %31 : vector<8x384xf32>
    %34 = arith.minimumf %32, %33 : vector<8x384xf32>
    %35 = arith.maximumf %22, %25 : vector<8x384xf32>
    %36 = arith.maximumf %28, %31 : vector<8x384xf32>
    %37 = arith.maximumf %35, %36 : vector<8x384xf32>
    %cst = arith.constant 0.000000e+00 : f32
    %38 = vector.broadcast %cst : f32 to vector<8x384xf32>
    %39 = arith.cmpf ogt, %34, %38 : vector<8x384xf32>
    %40 = vector.broadcast %3 : vector<1x384xf32> to vector<8x384xf32>
    %41 = arith.cmpf ogt, %37, %40 : vector<8x384xf32>
    %42 = vector.broadcast %4 : vector<1x384xf32> to vector<8x384xf32>
    %43 = arith.cmpf ole, %37, %42 : vector<8x384xf32>
    %44 = arith.andi %41, %43 : vector<8x384xi1>
    %45 = vector.broadcast %0 : vector<1x384xf32> to vector<8x384xf32>
    %46 = vector.broadcast %11 : vector<8x1xf32> to vector<8x384xf32>
    %47 = arith.subf %45, %46 : vector<8x384xf32>
    %48 = math.absf %47 : vector<8x384xf32>
    %49 = vector.broadcast %1 : vector<1x384xf32> to vector<8x384xf32>
    %50 = vector.broadcast %12 : vector<8x1xf32> to vector<8x384xf32>
    %51 = arith.subf %49, %50 : vector<8x384xf32>
    %52 = math.absf %51 : vector<8x384xf32>
    %53 = arith.maximumf %48, %52 : vector<8x384xf32>
    %54 = vector.broadcast %2 : vector<1x384xf32> to vector<8x384xf32>
    %55 = arith.cmpf olt, %53, %54 : vector<8x384xf32>
    %56 = arith.andi %39, %44 : vector<8x384xi1>
    %57 = arith.andi %56, %55 : vector<8x384xi1>
    %c2147483647_i32 = arith.constant 2147483647 : i32
    %58 = vector.shape_cast %19 : vector<8x1xi32> to vector<8x1xi32>
    %59 = vector.broadcast %58 : vector<8x1xi32> to vector<8x384xi32>
    %60 = vector.broadcast %c2147483647_i32 : i32 to vector<8x384xi32>
    %61 = arith.select %57, %59, %60 : vector<8x384xi1>, vector<8x384xi32>
    %cst_8 = arith.constant dense<2147483647> : vector<384xi32>
    %62 = vector.multi_reduction <minsi>, %61, %cst_8 [0] : vector<8x384xi32> to vector<384xi32>
    %63 = vector.shape_cast %62 : vector<384xi32> to vector<1x384xi32>
    %c2147483647_i32_9 = arith.constant 2147483647 : i32
    %64 = vector.broadcast %c2147483647_i32_9 : i32 to vector<1x384xi32>
    %65 = arith.cmpi slt, %63, %64 : vector<1x384xi32>
    %c16_i32 = arith.constant 16 : i32
    %66 = vector.broadcast %c16_i32 : i32 to vector<1x384xi32>
    %67 = arith.shrsi %63, %66 : vector<1x384xi32>
    %c65535_i32 = arith.constant 65535 : i32
    %68 = vector.broadcast %c65535_i32 : i32 to vector<1x384xi32>
    %69 = arith.andi %63, %68 : vector<1x384xi32>
    %70 = vector.broadcast %14 : vector<8x1xi32> to vector<8x384xi32>
    %71 = vector.broadcast %67 : vector<1x384xi32> to vector<8x384xi32>
    %72 = arith.cmpi eq, %70, %71 : vector<8x384xi32>
    %73 = arith.extui %72 : vector<8x384xi1> to vector<8x384xi32>
    %74 = arith.sitofp %73 : vector<8x384xi32> to vector<8x384xf32>
    %75 = arith.mulf %22, %74 : vector<8x384xf32>
    %cst_10 = arith.constant dense<0.000000e+00> : vector<384xf32>
    %76 = vector.multi_reduction <add>, %75, %cst_10 [0] : vector<8x384xf32> to vector<384xf32>
    %77 = vector.shape_cast %76 : vector<384xf32> to vector<1x384xf32>
    %78 = arith.mulf %25, %74 : vector<8x384xf32>
    %cst_11 = arith.constant dense<0.000000e+00> : vector<384xf32>
    %79 = vector.multi_reduction <add>, %78, %cst_11 [0] : vector<8x384xf32> to vector<384xf32>
    %80 = vector.shape_cast %79 : vector<384xf32> to vector<1x384xf32>
    %81 = arith.mulf %28, %74 : vector<8x384xf32>
    %cst_12 = arith.constant dense<0.000000e+00> : vector<384xf32>
    %82 = vector.multi_reduction <add>, %81, %cst_12 [0] : vector<8x384xf32> to vector<384xf32>
    %83 = vector.shape_cast %82 : vector<384xf32> to vector<1x384xf32>
    %84 = arith.mulf %31, %74 : vector<8x384xf32>
    %cst_13 = arith.constant dense<0.000000e+00> : vector<384xf32>
    %85 = vector.multi_reduction <add>, %84, %cst_13 [0] : vector<8x384xf32> to vector<384xf32>
    %86 = vector.shape_cast %85 : vector<384xf32> to vector<1x384xf32>
    %87 = arith.minimumf %77, %83 : vector<1x384xf32>
    %88 = arith.maximumf %77, %83 : vector<1x384xf32>
    %89 = arith.minimumf %80, %86 : vector<1x384xf32>
    %90 = arith.maximumf %80, %86 : vector<1x384xf32>
    %91 = arith.mulf %87, %89 : vector<1x384xf32>
    %cst_14 = arith.constant 0.000000e+00 : f32
    %92 = vector.broadcast %cst_14 : f32 to vector<1x384xf32>
    %93 = arith.maximumf %91, %92 : vector<1x384xf32>
    %94 = arith.mulf %88, %90 : vector<1x384xf32>
    %cst_15 = arith.constant 0.000000e+00 : f32
    %95 = vector.broadcast %cst_15 : f32 to vector<1x384xf32>
    %96 = arith.maximumf %94, %95 : vector<1x384xf32>
    %cst_16 = arith.constant 1.000000e-10 : f32
    %97 = vector.broadcast %cst_16 : f32 to vector<1x384xf32>
    %98 = arith.addf %96, %97 : vector<1x384xf32>
    %99 = arith.divf %93, %98 : vector<1x384xf32>
    %100 = math.sqrt %99 : vector<1x384xf32>
    %c0_i32 = arith.constant 0 : i32
    %101 = vector.broadcast %c0_i32 : i32 to vector<1x384xi32>
    %102 = arith.select %65, %69, %101 : vector<1x384xi1>, vector<1x384xi32>
    %103 = vector.shape_cast %102 : vector<1x384xi32> to vector<1x1x384xi32>
    %c0_17 = arith.constant 0 : index
    %c0_18 = arith.constant 0 : index
    %c0_19 = arith.constant 0 : index
    %104 = vector.load %arg4[%c0_17, %c0_18, %c0_19] : memref<1x1x384xi32, #tpu.memory_space<vmem>>, vector<1x1x384xi32>
    tpu.vector_store %arg4[%c0_17, %c0_18, %c0_19], %103 {strides = array<i32>} : memref<1x1x384xi32, #tpu.memory_space<vmem>>, vector<1x1x384xi32>,
    %cst_20 = arith.constant -1.000000e+00 : f32
    %105 = vector.broadcast %cst_20 : f32 to vector<1x384xf32>
    %106 = arith.select %65, %100, %105 : vector<1x384xi1>, vector<1x384xf32>
    %107 = vector.shape_cast %106 : vector<1x384xf32> to vector<1x1x384xf32>
    %c0_21 = arith.constant 0 : index
    %c0_22 = arith.constant 0 : index
    %c0_23 = arith.constant 0 : index
    %108 = vector.load %arg5[%c0_21, %c0_22, %c0_23] : memref<1x1x384xf32, #tpu.memory_space<vmem>>, vector<1x1x384xf32>
    tpu.vector_store %arg5[%c0_21, %c0_22, %c0_23], %107 {strides = array<i32>} : memref<1x1x384xf32, #tpu.memory_space<vmem>>, vector<1x1x384xf32>,
    %cst_24 = arith.constant -1.000000e+00 : f32
    %109 = vector.broadcast %cst_24 : f32 to vector<1x384xf32>
    %110 = arith.select %65, %77, %109 : vector<1x384xi1>, vector<1x384xf32>
    %c0_25 = arith.constant 0 : index
    %c0_26 = arith.constant 0 : index
    %c0_27 = arith.constant 0 : index
    %111 = vector.load %arg6[%c0_25, %c0_26, %c0_27] : memref<1x4x384xf32, #tpu.memory_space<vmem>>, vector<1x1x384xf32>
    %112 = vector.shape_cast %111 : vector<1x1x384xf32> to vector<1x384xf32>
    %113 = vector.shape_cast %110 : vector<1x384xf32> to vector<1x1x384xf32>
    tpu.vector_store %arg6[%c0_25, %c0_26, %c0_27], %113 {strides = array<i32>} : memref<1x4x384xf32, #tpu.memory_space<vmem>>, vector<1x1x384xf32>,
    %cst_28 = arith.constant -1.000000e+00 : f32
    %114 = vector.broadcast %cst_28 : f32 to vector<1x384xf32>
    %115 = arith.select %65, %80, %114 : vector<1x384xi1>, vector<1x384xf32>
    %c0_29 = arith.constant 0 : index
    %c1_30 = arith.constant 1 : index
    %c0_31 = arith.constant 0 : index
    %116 = vector.load %arg6[%c0_29, %c1_30, %c0_31] : memref<1x4x384xf32, #tpu.memory_space<vmem>>, vector<1x1x384xf32>
    %117 = vector.shape_cast %116 : vector<1x1x384xf32> to vector<1x384xf32>
    %118 = vector.shape_cast %115 : vector<1x384xf32> to vector<1x1x384xf32>
    tpu.vector_store %arg6[%c0_29, %c1_30, %c0_31], %118 {strides = array<i32>} : memref<1x4x384xf32, #tpu.memory_space<vmem>>, vector<1x1x384xf32>,
    %cst_32 = arith.constant -1.000000e+00 : f32
    %119 = vector.broadcast %cst_32 : f32 to vector<1x384xf32>
    %120 = arith.select %65, %83, %119 : vector<1x384xi1>, vector<1x384xf32>
    %c0_33 = arith.constant 0 : index
    %c2_34 = arith.constant 2 : index
    %c0_35 = arith.constant 0 : index
    %121 = vector.load %arg6[%c0_33, %c2_34, %c0_35] : memref<1x4x384xf32, #tpu.memory_space<vmem>>, vector<1x1x384xf32>
    %122 = vector.shape_cast %121 : vector<1x1x384xf32> to vector<1x384xf32>
    %123 = vector.shape_cast %120 : vector<1x384xf32> to vector<1x1x384xf32>
    tpu.vector_store %arg6[%c0_33, %c2_34, %c0_35], %123 {strides = array<i32>} : memref<1x4x384xf32, #tpu.memory_space<vmem>>, vector<1x1x384xf32>,
    %cst_36 = arith.constant -1.000000e+00 : f32
    %124 = vector.broadcast %cst_36 : f32 to vector<1x384xf32>
    %125 = arith.select %65, %86, %124 : vector<1x384xi1>, vector<1x384xf32>
    %c0_37 = arith.constant 0 : index
    %c3_38 = arith.constant 3 : index
    %c0_39 = arith.constant 0 : index
    %126 = vector.load %arg6[%c0_37, %c3_38, %c0_39] : memref<1x4x384xf32, #tpu.memory_space<vmem>>, vector<1x1x384xf32>
    %127 = vector.shape_cast %126 : vector<1x1x384xf32> to vector<1x384xf32>
    %128 = vector.shape_cast %125 : vector<1x384xf32> to vector<1x1x384xf32>
    tpu.vector_store %arg6[%c0_37, %c3_38, %c0_39], %128 {strides = array<i32>} : memref<1x4x384xf32, #tpu.memory_space<vmem>>, vector<1x1x384xf32>,
    return
  }
  func.func @transform_0(%arg0: i32, %arg1: i32) -> (i32, i32) {
    %c0_i32 = arith.constant 0 : i32
    %c0_i32_0 = arith.constant 0 : i32
    return %c0_i32, %arg1 : i32, i32
  }
  func.func @transform_1(%arg0: i32, %arg1: i32) -> (i32, i32, i32) {
    %c0_i32 = arith.constant 0 : i32
    %c0_i32_0 = arith.constant 0 : i32
    %c0_i32_1 = arith.constant 0 : i32
    return %arg0, %c0_i32, %c0_i32_0 : i32, i32, i32
  }
  func.func @transform_2(%arg0: i32, %arg1: i32) -> (i32, i32, i32) {
    %c0_i32 = arith.constant 0 : i32
    %c0_i32_0 = arith.constant 0 : i32
    return %arg0, %c0_i32, %arg1 : i32, i32, i32
  }
  func.func @transform_3(%arg0: i32, %arg1: i32) -> (i32, i32, i32) {
    %c0_i32 = arith.constant 0 : i32
    %c0_i32_0 = arith.constant 0 : i32
    return %arg0, %c0_i32, %arg1 : i32, i32, i32
  }
  func.func @transform_4(%arg0: i32, %arg1: i32) -> (i32, i32, i32) {
    %c0_i32 = arith.constant 0 : i32
    %c0_i32_0 = arith.constant 0 : i32
    return %arg0, %c0_i32, %arg1 : i32, i32, i32
  }
}

</mosaic_0001>

<llo_original>
// kernel: tpu_custom_call.1
$region0: #{tpu_custom_call.1}
  #allocation0 [shape = 'u32[]', space=smem, size = 0x4, offset = 0x4, fixed_abs, tag = 'smem constant byte address 0x4 - core index']
  #allocation1 [shape = 'u32[144,128]{1,0:T(1,128)}', space=vmem, size = 0x12000, scoped, tag = 'internal scratch']
  %s0 = inlined_call_operand.hbm [shape: f32[8,384], index: 0, kind: input, shape index: {}]
  %s1 = inlined_call_operand.hbm [shape: f32[2,8,8], index: 1, kind: input, shape index: {}]
  %s2 = inlined_call_operand.hbm [shape: s32[2,1,384], index: 2, kind: output, shape index: {0}]
  %s3 = inlined_call_operand.hbm [shape: f32[2,1,384], index: 3, kind: output, shape index: {1}]
  %s4 = inlined_call_operand.hbm [shape: f32[2,4,384], index: 4, kind: output, shape index: {2}]
  %5 = xla_tuple %s2, %s3, %s4
  %s6 = sld [smem:[#allocation0]]
  $region65: #{tpu_custom_call.1} parent=0
    _
  %s8 = ssub.s32 1, %s6
  %s9 = scalar_select 0, %s8, %s6
  $region1: #{tpu_custom_call.1} parent=0
    #allocation2 [shape = 'u8[12288]{0}', space=vmem, size = 0x3000, scoped, tag = 'input window, operand 0, single buffered']
    #allocation3 [shape = 's32[2]{0}', space=sflag, size = 0x8, scoped, tag = 'scoped memory for tpu_custom_call.1']
    #allocation4 [shape = 's32[2]{0}', space=sflag, size = 0x8, scoped, tag = 'scoped memory for tpu_custom_call.1']
    #allocation5 [shape = 'u8[8192]{0}', space=vmem, size = 0x2000, scoped, tag = 'input window, operand 1']
    #allocation6 [shape = 's32[2]{0}', space=sflag, size = 0x8, scoped, tag = 'scoped memory for tpu_custom_call.1']
    #allocation7 [shape = 'u8[3072]{0}', space=vmem, size = 0xc00, scoped, tag = 'output window, operand 0']
    #allocation8 [shape = 'u8[3072]{0}', space=vmem, size = 0xc00, scoped, tag = 'output window, operand 1']
    #allocation9 [shape = 's32[2]{0}', space=sflag, size = 0x8, scoped, tag = 'scoped memory for tpu_custom_call.1']
    #allocation10 [shape = 'u8[12288]{0}', space=vmem, size = 0x3000, scoped, tag = 'output window, operand 2']
    %10 = vsyncpa [#allocation3], 0
    %11 = vsyncpa [#allocation6], 0
    %s12 = scalar_lea.sflag [#allocation6], 1
    %13 = vsyncpa %s12, 0
    %14 = vsyncpa [#allocation4], 0
    %s15 = scalar_lea.sflag [#allocation4], 1
    %16 = vsyncpa %s15, 0
    %17 = vsyncpa [#allocation9], 0
    %s18 = scalar_lea.sflag [#allocation9], 1
    %19 = vsyncpa %s18, 0
    loop: start=0, step=1, limit=4
    $region2: #{tpu_custom_call.1} parent=1 // loop_pre_header
      _
    $region3: #{tpu_custom_call.1} parent=1 // loop_header
      %s21 = sphi 0, %s25
      %p22 = scmp.ge.s32.totalorder %s21, 4
      %s28 = sphi 0, %s40
      %s29 = sphi 0, %s36
      %s30 = sphi 0, %s28
      %s31 = sphi 0, %s29
      %s32 = sphi 0, %s30
      %s33 = sphi 0, %s31
      %s43 = sphi 0, %s45
      %s46 = sphi 0, %s43
      %s47 = sphi 0, %s46
      %s63 = sphi 0, %s47
      %s69 = sphi 0, %s71
      %s72 = sphi 0, %s69
      %s73 = sphi 0, %s72
      %s89 = sphi 0, %s73
      %s97 = sphi 0, %s99
      %s100 = sphi 0, %s97
      %s101 = sphi 0, %s100
      %s117 = sphi 0, %s101
      %s125 = sphi 0, %s127
      %s128 = sphi 0, %s125
      %s129 = sphi 0, %s128
      %s145 = sphi 0, %s129
      %s153 = sphi 0, %s155
      %s156 = sphi 0, %s153
      %s157 = sphi 0, %s156
      %s173 = sphi 0, %s157
    $region4: #{tpu_custom_call.1} parent=1 // loop_header_branch
      %24 = sbr.rel (%p22) target = $region8
    $region5: #{tpu_custom_call.1} parent=1 // loop_body
      %s26 = ssub.s32 %s21, 1
      %s27 = ssub.s32 %s21, 2
      %s34 = sadd.s32 1, %s29
      %p35 = scmp.ge.s32.totalorder %s34, 1
      %s36 = scalar_select %p35, 0, %s34
      %s37 = sadd.s32 1, %s28
      %s38 = scalar_select %p35, %s37, %s28
      %p39 = scmp.ge.s32.totalorder %s38, 2
      %s40 = scalar_select %p39, 0, %s38
      %s41 = ssub.s32 %s29, %s36
      %p42 = scmp.eq.s32.totalorder %s41, 0
      %s44 = sadd.s32 %s43, 1
      %s45 = scalar_select %p42, %s43, %s44
      %p48 = pneg %p42
      %p49 = scmp.eq.s32.totalorder %s21, 1
      %p50 = por %p48, %p49
      %p51 = scmp.ne.s32.totalorder %s43, %s46
      %p52 = scmp.eq.s32.totalorder %s21, 0
      %p53 = por %p51, %p52
      %p54 = scmp.ne.s32.totalorder %s43, %s46
      %p55 = scmp.eq.s32.totalorder %s26, 1
      %p56 = por %p54, %p55
      %p57 = scmp.ne.s32.totalorder %s46, %s47
      %p58 = scmp.eq.s32.totalorder %s26, 0
      %p59 = por %p57, %p58
      %p60 = scmp.ne.s32.totalorder %s46, %s47
      %p61 = scmp.eq.s32.totalorder %s27, 1
      %p62 = por %p60, %p61
      %p64 = scmp.ne.s32.totalorder %s47, %s63
      %p65 = scmp.eq.s32.totalorder %s27, 0
      %p66 = por %p64, %p65
      %s67 = ssub.s32 %s28, %s40
      %p68 = scmp.eq.s32.totalorder %s67, 0
      %s70 = sadd.s32 %s69, 1
      %s71 = scalar_select %p68, %s69, %s70
      %p74 = pneg %p68
      %p75 = scmp.eq.s32.totalorder %s21, 1
      %p76 = por %p74, %p75
      %p77 = scmp.ne.s32.totalorder %s69, %s72
      %p78 = scmp.eq.s32.totalorder %s21, 0
      %p79 = por %p77, %p78
      %p80 = scmp.ne.s32.totalorder %s69, %s72
      %p81 = scmp.eq.s32.totalorder %s26, 1
      %p82 = por %p80, %p81
      %p83 = scmp.ne.s32.totalorder %s72, %s73
      %p84 = scmp.eq.s32.totalorder %s26, 0
      %p85 = por %p83, %p84
      %p86 = scmp.ne.s32.totalorder %s72, %s73
      %p87 = scmp.eq.s32.totalorder %s27, 1
      %p88 = por %p86, %p87
      %p90 = scmp.ne.s32.totalorder %s73, %s89
      %p91 = scmp.eq.s32.totalorder %s27, 0
      %p92 = por %p90, %p91
      %s93 = ssub.s32 %s28, %s40
      %s94 = ssub.s32 %s29, %s36
      %s95 = sor.u32 %s93, %s94
      %p96 = scmp.eq.s32.totalorder %s95, 0
      %s98 = sadd.s32 %s97, 1
      %s99 = scalar_select %p96, %s97, %s98
      %p102 = pneg %p96
      %p103 = scmp.eq.s32.totalorder %s21, 1
      %p104 = por %p102, %p103
      %p105 = scmp.ne.s32.totalorder %s97, %s100
      %p106 = scmp.eq.s32.totalorder %s21, 0
      %p107 = por %p105, %p106
      %p108 = scmp.ne.s32.totalorder %s97, %s100
      %p109 = scmp.eq.s32.totalorder %s26, 1
      %p110 = por %p108, %p109
      %p111 = scmp.ne.s32.totalorder %s100, %s101
      %p112 = scmp.eq.s32.totalorder %s26, 0
      %p113 = por %p111, %p112
      %p114 = scmp.ne.s32.totalorder %s100, %s101
      %p115 = scmp.eq.s32.totalorder %s27, 1
      %p116 = por %p114, %p115
      %p118 = scmp.ne.s32.totalorder %s101, %s117
      %p119 = scmp.eq.s32.totalorder %s27, 0
      %p120 = por %p118, %p119
      %s121 = ssub.s32 %s28, %s40
      %s122 = ssub.s32 %s29, %s36
      %s123 = sor.u32 %s121, %s122
      %p124 = scmp.eq.s32.totalorder %s123, 0
      %s126 = sadd.s32 %s125, 1
      %s127 = scalar_select %p124, %s125, %s126
      %p130 = pneg %p124
      %p131 = scmp.eq.s32.totalorder %s21, 1
      %p132 = por %p130, %p131
      %p133 = scmp.ne.s32.totalorder %s125, %s128
      %p134 = scmp.eq.s32.totalorder %s21, 0
      %p135 = por %p133, %p134
      %p136 = scmp.ne.s32.totalorder %s125, %s128
      %p137 = scmp.eq.s32.totalorder %s26, 1
      %p138 = por %p136, %p137
      %p139 = scmp.ne.s32.totalorder %s128, %s129
      %p140 = scmp.eq.s32.totalorder %s26, 0
      %p141 = por %p139, %p140
      %p142 = scmp.ne.s32.totalorder %s128, %s129
      %p143 = scmp.eq.s32.totalorder %s27, 1
      %p144 = por %p142, %p143
      %p146 = scmp.ne.s32.totalorder %s129, %s145
      %p147 = scmp.eq.s32.totalorder %s27, 0
      %p148 = por %p146, %p147
      %s149 = ssub.s32 %s28, %s40
      %s150 = ssub.s32 %s29, %s36
      %s151 = sor.u32 %s149, %s150
      %p152 = scmp.eq.s32.totalorder %s151, 0
      %s154 = sadd.s32 %s153, 1
      %s155 = scalar_select %p152, %s153, %s154
      %p158 = pneg %p152
      %p159 = scmp.eq.s32.totalorder %s21, 1
      %p160 = por %p158, %p159
      %p161 = scmp.ne.s32.totalorder %s153, %s156
      %p162 = scmp.eq.s32.totalorder %s21, 0
      %p163 = por %p161, %p162
      %p164 = scmp.ne.s32.totalorder %s153, %s156
      %p165 = scmp.eq.s32.totalorder %s26, 1
      %p166 = por %p164, %p165
      %p167 = scmp.ne.s32.totalorder %s156, %s157
      %p168 = scmp.eq.s32.totalorder %s26, 0
      %p169 = por %p167, %p168
      %p170 = scmp.ne.s32.totalorder %s156, %s157
      %p171 = scmp.eq.s32.totalorder %s27, 1
      %p172 = por %p170, %p171
      %p174 = scmp.ne.s32.totalorder %s157, %s173
      %p175 = scmp.eq.s32.totalorder %s27, 0
      %p176 = por %p174, %p175
      %p177 = scmp.le.s32.totalorder 1, %s21
      %p178 = scmp.lt.s32.totalorder %s21, 3
      %p179 = pnand %p177, %p178
      %p180 = pneg %p179
      // Predicated region
      $region9: #{tpu_custom_call.1} parent=5 // pred_check
        _
      $region10: #{tpu_custom_call.1} parent=5 // pred_check_branch
        %182 = sbr.rel (%p179) target = $region12
      $region11: #{tpu_custom_call.1} parent=5 // pred_region
        %s183 = ssub.s32 %s21, 1
        // Predicated region
        $region13: #{tpu_custom_call.1} parent=11 // pred_check
          %p184 = pneg %p59
        $region14: #{tpu_custom_call.1} parent=11 // pred_check_branch
          %186 = sbr.rel (%p184) target = $region16
        $region15: #{tpu_custom_call.1} parent=11 // pred_region
          %s187 = smul.u32 3, %s31
          %s189 = ssub.s32 384, 384
          %190 = vsyncadd [#allocation3], %s189
          %s191 = smul.addr %s187, 128
          %s192 = scalar_lea.hbm %s0, %s191
          %s194 = sshll.u32 [#allocation2], 4
          %s195 = int_to_ptr.vmem [resolvable:$true] %s194
          %197 = dma.hbm_to_vmem [thread:$0]  %s192, 384, %s195, [#allocation3]
        $region16: #{tpu_custom_call.1} parent=11 // pred_fallthru
          _
      $region12: #{tpu_custom_call.1} parent=5 // pred_fallthru
        _
      %p198 = scmp.lt.s32.totalorder %s21, 2
      // Predicated region
      $region17: #{tpu_custom_call.1} parent=5 // pred_check
        %p199 = pneg %p198
      $region18: #{tpu_custom_call.1} parent=5 // pred_check_branch
        %201 = sbr.rel (%p199) target = $region20
      $region19: #{tpu_custom_call.1} parent=5 // pred_region
        // Predicated region
        $region21: #{tpu_custom_call.1} parent=19 // pred_check
          %p202 = pneg %p79
        $region22: #{tpu_custom_call.1} parent=19 // pred_check_branch
          %204 = sbr.rel (%p202) target = $region24
        $region23: #{tpu_custom_call.1} parent=19 // pred_region
          %s205 = sand.u32 %s69, 1
          %s206 = scalar_lea.sflag [#allocation6], %s205
          %s207 = sand.u32 %s69, 1
          %s208 = smul.addr %s207, 8
          %s209 = scalar_lea.vmem [#allocation5], %s208
          %s211 = ssub.s32 128, 128
          %212 = vsyncadd %s206, %s211
          %s213 = smul.addr %s28, 128
          %s214 = scalar_lea.hbm %s1, %s213
          %s216 = sshll.u32 %s209, 4
          %s217 = int_to_ptr.vmem [resolvable:$true] %s216
          %219 = dma.hbm_to_vmem [thread:$0]  %s214, 128, %s217, %s206
        $region24: #{tpu_custom_call.1} parent=19 // pred_fallthru
          _
      $region20: #{tpu_custom_call.1} parent=5 // pred_fallthru
        _
      %p220 = scmp.le.s32.totalorder 1, %s21
      %p221 = scmp.lt.s32.totalorder %s21, 3
      %p222 = pnand %p220, %p221
      %p223 = pneg %p222
      // Predicated region
      $region25: #{tpu_custom_call.1} parent=5 // pred_check
        _
      $region26: #{tpu_custom_call.1} parent=5 // pred_check_branch
        %225 = sbr.rel (%p222) target = $region28
      $region27: #{tpu_custom_call.1} parent=5 // pred_region
        %s226 = ssub.s32 %s21, 1
        // Predicated region
        $region29: #{tpu_custom_call.1} parent=27 // pred_check
          %p227 = pneg %p59
        $region30: #{tpu_custom_call.1} parent=27 // pred_check_branch
          %229 = sbr.rel (%p227) target = $region32
        $region31: #{tpu_custom_call.1} parent=27 // pred_region
          %230 = dma.done [#allocation3], 384
        $region32: #{tpu_custom_call.1} parent=27 // pred_fallthru
          _
        %s231 = sand.u32 %s72, 1
        %s232 = scalar_lea.sflag [#allocation6], %s231
        %s233 = sand.u32 %s72, 1
        %s234 = smul.addr %s233, 8
        %s235 = scalar_lea.vmem [#allocation5], %s234
        // Predicated region
        $region33: #{tpu_custom_call.1} parent=27 // pred_check
          %p236 = pneg %p85
        $region34: #{tpu_custom_call.1} parent=27 // pred_check_branch
          %238 = sbr.rel (%p236) target = $region36
        $region35: #{tpu_custom_call.1} parent=27 // pred_region
          %239 = dma.done %s232, 128
        $region36: #{tpu_custom_call.1} parent=27 // pred_fallthru
          _
        %p240 = pneg %p59
        %p241 = pneg %p56
        %s242 = sand.u32 %s72, 1
        %s243 = scalar_lea.sflag [#allocation6], %s242
        %s244 = sand.u32 %s72, 1
        %s245 = smul.addr %s244, 8
        %s246 = scalar_lea.vmem [#allocation5], %s245
        %p247 = pneg %p85
        %p248 = pneg %p82
        %p249 = pneg %p113
        %p250 = pneg %p110
        %s251 = sand.u32 %s100, 1
        %s252 = scalar_lea.sflag [#allocation4], %s251
        %s253 = sand.u32 %s100, 1
        %s254 = smul.addr %s253, 3
        %s255 = scalar_lea.vmem [#allocation7], %s254
        %p256 = pneg %p141
        %p257 = pneg %p138
        %s258 = sand.u32 %s26, 1
        %s259 = scalar_lea.sflag [#allocation9], %s258
        %s260 = sand.u32 %s128, 1
        %s261 = smul.addr %s260, 3
        %s262 = scalar_lea.vmem [#allocation8], %s261
        %p263 = pneg %p169
        %p264 = pneg %p166
        %s265 = sand.u32 %s26, 1
        %s266 = scalar_lea.sflag [#allocation9], %s265
        %s267 = sand.u32 %s156, 1
        %s268 = smul.addr %s267, 12
        %s269 = scalar_lea.vmem [#allocation10], %s268
        %s270 = smul.u32 3, %s31
        %s271 = smul.u32 3, %s31
        %s272 = smul.u32 3, %s31
        %s273 = smul.u32 3, %s31
        %v274 = vld [vmem:[#allocation2] ss:$8 sm:$0x7]
        %s275 = scalar_lea.vmem [#allocation2], 1
        %v276 = vld [vmem:[%s275] ss:$8 sm:$0x7]
        %s277 = scalar_lea.vmem [#allocation2], 2
        %v278 = vld [vmem:[%s277] ss:$8 sm:$0x7]
        %s279 = scalar_lea.vmem [#allocation2], 3
        %v280 = vld [vmem:[%s279] ss:$8 sm:$0x7]
        %s281 = scalar_lea.vmem [#allocation2], 4
        %v282 = vld [vmem:[%s281] ss:$8 sm:$0x7]
        %v283 = vld [vmem:[%s235] sm:$0xff]
        %v284 = vcvt.f32.s32.to.zero.pseudo %v283
        %v285 = vmul.u32 %v284, 65536
        %286 = vrot.lane.b32.xlu0 %v284, 127
        %v287 = vpop.permute.xlu0 %286
        %v288 = vadd.s32 %v285, %v287
        %v290 = vlaneseq
        %v291 = vshrl.u32 %v290, 7
        %v292 = vsub.s32 0, %v291
        %v293 = vrot.slane %v274, %v292
        %v294 = vlaneseq
        %v295 = vshrl.u32 %v294, 7
        %v296 = vsub.s32 1, %v295
        %v297 = vrot.slane %v274, %v296
        %v298 = vlaneseq
        %v299 = vshrl.u32 %v298, 7
        %v300 = vsub.s32 2, %v299
        %v301 = vrot.slane %v274, %v300
        %306 = vset.pattern.permute.xlu0 0
        %307 = vperm.xlu0 %306, %v283
        %v308 = vpop.permute.xlu0 %307
        %v310 = vsub.f32 %v293, %v308
        %v311 = vsub.f32 %v297, %v308
        %v312 = vsub.f32 %v301, %v308
        %v314 = vlaneseq
        %v315 = vshrl.u32 %v314, 7
        %v316 = vsub.s32 0, %v315
        %v317 = vrot.slane %v276, %v316
        %v318 = vlaneseq
        %v319 = vshrl.u32 %v318, 7
        %v320 = vsub.s32 1, %v319
        %v321 = vrot.slane %v276, %v320
        %v322 = vlaneseq
        %v323 = vshrl.u32 %v322, 7
        %v324 = vsub.s32 2, %v323
        %v325 = vrot.slane %v276, %v324
        %329 = vset.pattern.permute.xlu0 1
        %330 = vperm.xlu0 %329, %v283
        %v331 = vpop.permute.xlu0 %330
        %v333 = vsub.f32 %v317, %v331
        %v334 = vsub.f32 %v321, %v331
        %v335 = vsub.f32 %v325, %v331
        %336 = vset.pattern.permute.xlu0 2
        %337 = vperm.xlu0 %336, %v283
        %v338 = vpop.permute.xlu0 %337
        %v340 = vsub.f32 %v338, %v293
        %v341 = vsub.f32 %v338, %v297
        %v342 = vsub.f32 %v338, %v301
        %343 = vset.pattern.permute.xlu0 3
        %344 = vperm.xlu0 %343, %v283
        %v345 = vpop.permute.xlu0 %344
        %v347 = vsub.f32 %v345, %v317
        %v348 = vsub.f32 %v345, %v321
        %v349 = vsub.f32 %v345, %v325
        %v350 = vmin.f32 %v310, %v333
        %v351 = vmin.f32 %v311, %v334
        %v352 = vmin.f32 %v312, %v335
        %v353 = vmin.f32 %v340, %v347
        %v354 = vmin.f32 %v341, %v348
        %v355 = vmin.f32 %v342, %v349
        %v356 = vmin.f32 %v350, %v353
        %v357 = vmin.f32 %v351, %v354
        %v358 = vmin.f32 %v352, %v355
        %v359 = vmax.f32 %v310, %v333
        %v360 = vmax.f32 %v311, %v334
        %v361 = vmax.f32 %v312, %v335
        %v362 = vmax.f32 %v340, %v347
        %v363 = vmax.f32 %v341, %v348
        %v364 = vmax.f32 %v342, %v349
        %v365 = vmax.f32 %v359, %v362
        %v366 = vmax.f32 %v360, %v363
        %v367 = vmax.f32 %v361, %v364
        %vm368 = vcmp.gt.f32.partialorder %v356, 0.0
        %vm369 = vcmp.gt.f32.partialorder %v357, 0.0
        %vm370 = vcmp.gt.f32.partialorder %v358, 0.0
        %v372 = vlaneseq
        %v373 = vshrl.u32 %v372, 7
        %v374 = vsub.s32 0, %v373
        %v375 = vrot.slane %v280, %v374
        %v376 = vlaneseq
        %v377 = vshrl.u32 %v376, 7
        %v378 = vsub.s32 1, %v377
        %v379 = vrot.slane %v280, %v378
        %v380 = vlaneseq
        %v381 = vshrl.u32 %v380, 7
        %v382 = vsub.s32 2, %v381
        %v383 = vrot.slane %v280, %v382
        %vm387 = vcmp.gt.f32.partialorder %v365, %v375
        %vm388 = vcmp.gt.f32.partialorder %v366, %v379
        %vm389 = vcmp.gt.f32.partialorder %v367, %v383
        %v391 = vlaneseq
        %v392 = vshrl.u32 %v391, 7
        %v393 = vsub.s32 0, %v392
        %v394 = vrot.slane %v282, %v393
        %v395 = vlaneseq
        %v396 = vshrl.u32 %v395, 7
        %v397 = vsub.s32 1, %v396
        %v398 = vrot.slane %v282, %v397
        %v399 = vlaneseq
        %v400 = vshrl.u32 %v399, 7
        %v401 = vsub.s32 2, %v400
        %v402 = vrot.slane %v282, %v401
        %vm406 = vcmp.le.f32.partialorder %v365, %v394
        %vm407 = vcmp.le.f32.partialorder %v366, %v398
        %vm408 = vcmp.le.f32.partialorder %v367, %v402
        %vm409 = vmand %vm387, %vm406
        %vm410 = vmand %vm388, %vm407
        %vm411 = vmand %vm389, %vm408
        %412 = vset.pattern.permute.xlu0 4
        %413 = vperm.xlu0 %412, %v283
        %v414 = vpop.permute.xlu0 %413
        %v416 = vsub.f32 %v293, %v414
        %v417 = vsub.f32 %v297, %v414
        %v418 = vsub.f32 %v301, %v414
        %v419 = vand.u32 2147483647, %v416
        %v420 = vand.u32 2147483647, %v417
        %v421 = vand.u32 2147483647, %v418
        %422 = vset.pattern.permute.xlu0 5
        %423 = vperm.xlu0 %422, %v283
        %v424 = vpop.permute.xlu0 %423
        %v426 = vsub.f32 %v317, %v424
        %v427 = vsub.f32 %v321, %v424
        %v428 = vsub.f32 %v325, %v424
        %v429 = vand.u32 2147483647, %v426
        %v430 = vand.u32 2147483647, %v427
        %v431 = vand.u32 2147483647, %v428
        %v432 = vmax.f32 %v419, %v429
        %v433 = vmax.f32 %v420, %v430
        %v434 = vmax.f32 %v421, %v431
        %v436 = vlaneseq
        %v437 = vshrl.u32 %v436, 7
        %v438 = vsub.s32 0, %v437
        %v439 = vrot.slane %v278, %v438
        %v440 = vlaneseq
        %v441 = vshrl.u32 %v440, 7
        %v442 = vsub.s32 1, %v441
        %v443 = vrot.slane %v278, %v442
        %v444 = vlaneseq
        %v445 = vshrl.u32 %v444, 7
        %v446 = vsub.s32 2, %v445
        %v447 = vrot.slane %v278, %v446
        %vm451 = vcmp.lt.f32.partialorder %v432, %v439
        %vm452 = vcmp.lt.f32.partialorder %v433, %v443
        %vm453 = vcmp.lt.f32.partialorder %v434, %v447
        %vm454 = vmand %vm368, %vm409
        %vm455 = vmand %vm369, %vm410
        %vm456 = vmand %vm370, %vm411
        %vm457 = vmand %vm454, %vm451
        %vm458 = vmand %vm455, %vm452
        %vm459 = vmand %vm456, %vm453
        %460 = vset.pattern.permute.xlu0 6
        %461 = vperm.xlu0 %460, %v288
        %v462 = vpop.permute.xlu0 %461
        %v463 = vsel %vm457, %v462, 2147483647
        %v464 = vsel %vm458, %v462, 2147483647
        %v465 = vsel %vm459, %v462, 2147483647
        %v466 = vrot.slane %v463, 4
        %vm467 = vcmp.lt.s32.totalorder %v463, %v466
        %v468 = vsel %vm467, %v463, %v466
        %v469 = vrot.slane %v468, 2
        %vm470 = vcmp.lt.s32.totalorder %v468, %v469
        %v471 = vsel %vm470, %v468, %v469
        %v472 = vrot.slane %v471, 1
        %vm473 = vcmp.lt.s32.totalorder %v471, %v472
        %v474 = vsel %vm473, %v471, %v472
        %v475 = vrot.slane %v464, 4
        %vm476 = vcmp.lt.s32.totalorder %v464, %v475
        %v477 = vsel %vm476, %v464, %v475
        %v478 = vrot.slane %v477, 2
        %vm479 = vcmp.lt.s32.totalorder %v477, %v478
        %v480 = vsel %vm479, %v477, %v478
        %v481 = vrot.slane %v480, 1
        %vm482 = vcmp.lt.s32.totalorder %v480, %v481
        %v483 = vsel %vm482, %v480, %v481
        %v484 = vrot.slane %v465, 4
        %vm485 = vcmp.lt.s32.totalorder %v465, %v484
        %v486 = vsel %vm485, %v465, %v484
        %v487 = vrot.slane %v486, 2
        %vm488 = vcmp.lt.s32.totalorder %v486, %v487
        %v489 = vsel %vm488, %v486, %v487
        %v490 = vrot.slane %v489, 1
        %vm491 = vcmp.lt.s32.totalorder %v489, %v490
        %v492 = vsel %vm491, %v489, %v490
        %vm493 = vcmp.lt.s32.totalorder %v474, 2147483647
        %vm494 = vcmp.lt.s32.totalorder %v483, 2147483647
        %vm495 = vcmp.lt.s32.totalorder %v492, 2147483647
        %v496 = vshra.s32 %v474, 16
        %v497 = vshra.s32 %v483, 16
        %v498 = vshra.s32 %v492, 16
        %v499 = vand.u32 %v474, 65535
        %v500 = vand.u32 %v483, 65535
        %v501 = vand.u32 %v492, 65535
        %502 = vset.pattern.permute.xlu0 6
        %503 = vperm.xlu0 %502, %v284
        %v504 = vpop.permute.xlu0 %503
        %vm505 = vcmp.eq.s32.totalorder %v504, %v496
        %vm506 = vcmp.eq.s32.totalorder %v504, %v497
        %vm507 = vcmp.eq.s32.totalorder %v504, %v498
        %v508 = vsel %vm505, 1, 0
        %v509 = vsel %vm506, 1, 0
        %v510 = vsel %vm507, 1, 0
        %v511 = vcvt.s32.f32 %v508
        %v512 = vcvt.s32.f32 %v509
        %v513 = vcvt.s32.f32 %v510
        %v514 = vmul.f32 %v310, %v511
        %v515 = vmul.f32 %v311, %v512
        %v516 = vmul.f32 %v312, %v513
        %v517 = vrot.slane %v514, 4
        %v518 = vadd.f32 %v514, %v517
        %v519 = vrot.slane %v518, 2
        %v520 = vadd.f32 %v518, %v519
        %v521 = vrot.slane %v520, 1
        %v522 = vadd.f32 %v520, %v521
        %v523 = vrot.slane %v515, 4
        %v524 = vadd.f32 %v515, %v523
        %v525 = vrot.slane %v524, 2
        %v526 = vadd.f32 %v524, %v525
        %v527 = vrot.slane %v526, 1
        %v528 = vadd.f32 %v526, %v527
        %v529 = vrot.slane %v516, 4
        %v530 = vadd.f32 %v516, %v529
        %v531 = vrot.slane %v530, 2
        %v532 = vadd.f32 %v530, %v531
        %v533 = vrot.slane %v532, 1
        %v534 = vadd.f32 %v532, %v533
        %v535 = vmul.f32 %v333, %v511
        %v536 = vmul.f32 %v334, %v512
        %v537 = vmul.f32 %v335, %v513
        %v538 = vrot.slane %v535, 4
        %v539 = vadd.f32 %v535, %v538
        %v540 = vrot.slane %v539, 2
        %v541 = vadd.f32 %v539, %v540
        %v542 = vrot.slane %v541, 1
        %v543 = vadd.f32 %v541, %v542
        %v544 = vrot.slane %v536, 4
        %v545 = vadd.f32 %v536, %v544
        %v546 = vrot.slane %v545, 2
        %v547 = vadd.f32 %v545, %v546
        %v548 = vrot.slane %v547, 1
        %v549 = vadd.f32 %v547, %v548
        %v550 = vrot.slane %v537, 4
        %v551 = vadd.f32 %v537, %v550
        %v552 = vrot.slane %v551, 2
        %v553 = vadd.f32 %v551, %v552
        %v554 = vrot.slane %v553, 1
        %v555 = vadd.f32 %v553, %v554
        %v556 = vmul.f32 %v340, %v511
        %v557 = vmul.f32 %v341, %v512
        %v558 = vmul.f32 %v342, %v513
        %v559 = vrot.slane %v556, 4
        %v560 = vadd.f32 %v556, %v559
        %v561 = vrot.slane %v560, 2
        %v562 = vadd.f32 %v560, %v561
        %v563 = vrot.slane %v562, 1
        %v564 = vadd.f32 %v562, %v563
        %v565 = vrot.slane %v557, 4
        %v566 = vadd.f32 %v557, %v565
        %v567 = vrot.slane %v566, 2
        %v568 = vadd.f32 %v566, %v567
        %v569 = vrot.slane %v568, 1
        %v570 = vadd.f32 %v568, %v569
        %v571 = vrot.slane %v558, 4
        %v572 = vadd.f32 %v558, %v571
        %v573 = vrot.slane %v572, 2
        %v574 = vadd.f32 %v572, %v573
        %v575 = vrot.slane %v574, 1
        %v576 = vadd.f32 %v574, %v575
        %v577 = vmul.f32 %v347, %v511
        %v578 = vmul.f32 %v348, %v512
        %v579 = vmul.f32 %v349, %v513
        %v580 = vrot.slane %v577, 4
        %v581 = vadd.f32 %v577, %v580
        %v582 = vrot.slane %v581, 2
        %v583 = vadd.f32 %v581, %v582
        %v584 = vrot.slane %v583, 1
        %v585 = vadd.f32 %v583, %v584
        %v586 = vrot.slane %v578, 4
        %v587 = vadd.f32 %v578, %v586
        %v588 = vrot.slane %v587, 2
        %v589 = vadd.f32 %v587, %v588
        %v590 = vrot.slane %v589, 1
        %v591 = vadd.f32 %v589, %v590
        %v592 = vrot.slane %v579, 4
        %v593 = vadd.f32 %v579, %v592
        %v594 = vrot.slane %v593, 2
        %v595 = vadd.f32 %v593, %v594
        %v596 = vrot.slane %v595, 1
        %v597 = vadd.f32 %v595, %v596
        %v598 = vmin.f32 %v522, %v564
        %v599 = vmin.f32 %v528, %v570
        %v600 = vmin.f32 %v534, %v576
        %v601 = vmax.f32 %v522, %v564
        %v602 = vmax.f32 %v528, %v570
        %v603 = vmax.f32 %v534, %v576
        %v604 = vmin.f32 %v543, %v585
        %v605 = vmin.f32 %v549, %v591
        %v606 = vmin.f32 %v555, %v597
        %v607 = vmax.f32 %v543, %v585
        %v608 = vmax.f32 %v549, %v591
        %v609 = vmax.f32 %v555, %v597
        %v610 = vmul.f32 %v598, %v604
        %v611 = vmul.f32 %v599, %v605
        %v612 = vmul.f32 %v600, %v606
        %v613 = vmax.f32 %v610, 0.0
        %v614 = vmax.f32 %v611, 0.0
        %v615 = vmax.f32 %v612, 0.0
        %v616 = vmul.f32 %v601, %v607
        %v617 = vmul.f32 %v602, %v608
        %v618 = vmul.f32 %v603, %v609
        %v619 = vmax.f32 %v616, 0.0
        %v620 = vmax.f32 %v617, 0.0
        %v621 = vmax.f32 %v618, 0.0
        %v622 = vadd.f32 %v619, 1e-10
        %v623 = vadd.f32 %v620, 1e-10
        %v624 = vadd.f32 %v621, 1e-10
        %v625 = vrcp.pop %v622
        %v626 = vmul.f32 %v613, %v625
        %v627 = vrcp.pop %v623
        %v628 = vmul.f32 %v614, %v627
        %v629 = vrcp.pop %v624
        %v630 = vmul.f32 %v615, %v629
        %v631 = vrsqrt.pop %v626
        %v632 = vmul.f32 %v626, %v631
        %vm633 = vcmp.eq.f32.partialorder %v626, inf
        %v634 = vsel %vm633, %v626, %v632
        %vm635 = vcmp.eq.f32.partialorder %v626, 0.0
        %v636 = vand.u32 %v626, 2147483648
        %v637 = vsel %vm635, %v636, %v634
        %v638 = vrsqrt.pop %v628
        %v639 = vmul.f32 %v628, %v638
        %vm640 = vcmp.eq.f32.partialorder %v628, inf
        %v641 = vsel %vm640, %v628, %v639
        %vm642 = vcmp.eq.f32.partialorder %v628, 0.0
        %v643 = vand.u32 %v628, 2147483648
        %v644 = vsel %vm642, %v643, %v641
        %v645 = vrsqrt.pop %v630
        %v646 = vmul.f32 %v630, %v645
        %vm647 = vcmp.eq.f32.partialorder %v630, inf
        %v648 = vsel %vm647, %v630, %v646
        %vm649 = vcmp.eq.f32.partialorder %v630, 0.0
        %v650 = vand.u32 %v630, 2147483648
        %v651 = vsel %vm649, %v650, %v648
        %v652 = vsel %vm493, %v499, 0
        %v653 = vsel %vm494, %v500, 0
        %v654 = vsel %vm495, %v501, 0
        %v655 = vcombine.low %v652, %v653
        %v657 = vunpack.c.l.s4 1966171168
        %v658 = vunpack.c.0.s8 %v657
        %v659 = vlaneseq
        %v660 = vshrl.u32 %v659, 7
        %v661 = vsub.s32 %v658, %v660
        %v662 = vrot.slane %v655, %v661
        %v664 = vunpack.c.l.s4 1966171168
        %v665 = vunpack.c.0.s8 %v664
        %v666 = vlaneseq
        %v667 = vshrl.u32 %v666, 7
        %v668 = vsub.s32 %v665, %v667
        %v669 = vrot.slane %v654, %v668
        %v670 = vcombine.low %v662, %v669
        %v672 = vunpack.c.l.s4 1966171168
        %v673 = vunpack.c.0.s8 %v672
        %v674 = vlaneseq
        %v675 = vshrl.u32 %v674, 7
        %v676 = vsub.s32 %v673, %v675
        %v677 = vrot.slane %v670, %v676
        %v678 = vlaneseq
        %vm679 = vcmp.ge.s32.totalorder %v678, 0
        %vm680 = vcmp.lt.s32.totalorder %v678, 384
        %vm681 = vmand %vm679, %vm680
        %682 = vst.msk [vmem:[%s255] sm:$0x7] %vm681, %v677
        %v683 = vsel %vm493, %v637, -1.0
        %v684 = vsel %vm494, %v644, -1.0
        %v685 = vsel %vm495, %v651, -1.0
        %v689 = vcombine.low %v683, %v684
        %v691 = vunpack.c.l.s4 1966171168
        %v692 = vunpack.c.0.s8 %v691
        %v693 = vlaneseq
        %v694 = vshrl.u32 %v693, 7
        %v695 = vsub.s32 %v692, %v694
        %v696 = vrot.slane %v689, %v695
        %v698 = vunpack.c.l.s4 1966171168
        %v699 = vunpack.c.0.s8 %v698
        %v700 = vlaneseq
        %v701 = vshrl.u32 %v700, 7
        %v702 = vsub.s32 %v699, %v701
        %v703 = vrot.slane %v685, %v702
        %v704 = vcombine.low %v696, %v703
        %v706 = vunpack.c.l.s4 1966171168
        %v707 = vunpack.c.0.s8 %v706
        %v708 = vlaneseq
        %v709 = vshrl.u32 %v708, 7
        %v710 = vsub.s32 %v707, %v709
        %v711 = vrot.slane %v704, %v710
        %713 = vst.msk [vmem:[%s262] sm:$0x7] %vm681, %v711
        %v714 = vsel %vm493, %v522, -1.0
        %v715 = vsel %vm494, %v528, -1.0
        %v716 = vsel %vm495, %v534, -1.0
        %v720 = vcombine.low %v714, %v715
        %v722 = vunpack.c.l.s4 1966171168
        %v723 = vunpack.c.0.s8 %v722
        %v724 = vlaneseq
        %v725 = vshrl.u32 %v724, 7
        %v726 = vsub.s32 %v723, %v725
        %v727 = vrot.slane %v720, %v726
        %v729 = vunpack.c.l.s4 1966171168
        %v730 = vunpack.c.0.s8 %v729
        %v731 = vlaneseq
        %v732 = vshrl.u32 %v731, 7
        %v733 = vsub.s32 %v730, %v732
        %v734 = vrot.slane %v716, %v733
        %v735 = vcombine.low %v727, %v734
        %v737 = vunpack.c.l.s4 1966171168
        %v738 = vunpack.c.0.s8 %v737
        %v739 = vlaneseq
        %v740 = vshrl.u32 %v739, 7
        %v741 = vsub.s32 %v738, %v740
        %v742 = vrot.slane %v735, %v741
        %744 = vst.msk [vmem:[%s269] ss:$4 sm:$0x7] %vm681, %v742
        %v745 = vsel %vm493, %v543, -1.0
        %v746 = vsel %vm494, %v549, -1.0
        %v747 = vsel %vm495, %v555, -1.0
        %v751 = vcombine.low %v745, %v746
        %v753 = vunpack.c.l.s4 1966171168
        %v754 = vunpack.c.0.s8 %v753
        %v755 = vlaneseq
        %v756 = vshrl.u32 %v755, 7
        %v757 = vsub.s32 %v754, %v756
        %v758 = vrot.slane %v751, %v757
        %v760 = vunpack.c.l.s4 1966171168
        %v761 = vunpack.c.0.s8 %v760
        %v762 = vlaneseq
        %v763 = vshrl.u32 %v762, 7
        %v764 = vsub.s32 %v761, %v763
        %v765 = vrot.slane %v747, %v764
        %v766 = vcombine.low %v758, %v765
        %v768 = vunpack.c.l.s4 1966171168
        %v769 = vunpack.c.0.s8 %v768
        %v770 = vlaneseq
        %v771 = vshrl.u32 %v770, 7
        %v772 = vsub.s32 %v769, %v771
        %v773 = vrot.slane %v766, %v772
        %s775 = scalar_lea.vmem %s269, 1 [#allocation10]
        %776 = vst.msk [vmem:[%s775] ss:$4 sm:$0x7] %vm681, %v773
        %v777 = vsel %vm493, %v564, -1.0
        %v778 = vsel %vm494, %v570, -1.0
        %v779 = vsel %vm495, %v576, -1.0
        %v783 = vcombine.low %v777, %v778
        %v785 = vunpack.c.l.s4 1966171168
        %v786 = vunpack.c.0.s8 %v785
        %v787 = vlaneseq
        %v788 = vshrl.u32 %v787, 7
        %v789 = vsub.s32 %v786, %v788
        %v790 = vrot.slane %v783, %v789
        %v792 = vunpack.c.l.s4 1966171168
        %v793 = vunpack.c.0.s8 %v792
        %v794 = vlaneseq
        %v795 = vshrl.u32 %v794, 7
        %v796 = vsub.s32 %v793, %v795
        %v797 = vrot.slane %v779, %v796
        %v798 = vcombine.low %v790, %v797
        %v800 = vunpack.c.l.s4 1966171168
        %v801 = vunpack.c.0.s8 %v800
        %v802 = vlaneseq
        %v803 = vshrl.u32 %v802, 7
        %v804 = vsub.s32 %v801, %v803
        %v805 = vrot.slane %v798, %v804
        %s807 = scalar_lea.vmem %s269, 2 [#allocation10]
        %808 = vst.msk [vmem:[%s807] ss:$4 sm:$0x7] %vm681, %v805
        %v809 = vsel %vm493, %v585, -1.0
        %v810 = vsel %vm494, %v591, -1.0
        %v811 = vsel %vm495, %v597, -1.0
        %v815 = vcombine.low %v809, %v810
        %v817 = vunpack.c.l.s4 1966171168
        %v818 = vunpack.c.0.s8 %v817
        %v819 = vlaneseq
        %v820 = vshrl.u32 %v819, 7
        %v821 = vsub.s32 %v818, %v820
        %v822 = vrot.slane %v815, %v821
        %v824 = vunpack.c.l.s4 1966171168
        %v825 = vunpack.c.0.s8 %v824
        %v826 = vlaneseq
        %v827 = vshrl.u32 %v826, 7
        %v828 = vsub.s32 %v825, %v827
        %v829 = vrot.slane %v811, %v828
        %v830 = vcombine.low %v822, %v829
        %v832 = vunpack.c.l.s4 1966171168
        %v833 = vunpack.c.0.s8 %v832
        %v834 = vlaneseq
        %v835 = vshrl.u32 %v834, 7
        %v836 = vsub.s32 %v833, %v835
        %v837 = vrot.slane %v830, %v836
        %s839 = scalar_lea.vmem %s269, 3 [#allocation10]
        %840 = vst.msk [vmem:[%s839] ss:$4 sm:$0x7] %vm681, %v837
        %s841 = sand.u32 %s100, 1
        %s842 = scalar_lea.sflag [#allocation4], %s841
        %s843 = sand.u32 %s100, 1
        %s844 = smul.addr %s843, 3
        %s845 = scalar_lea.vmem [#allocation7], %s844
        %s846 = sand.u32 %s26, 1
        %s847 = scalar_lea.sflag [#allocation9], %s846
        %s848 = sand.u32 %s128, 1
        %s849 = smul.addr %s848, 3
        %s850 = scalar_lea.vmem [#allocation8], %s849
        %s851 = sand.u32 %s26, 1
        %s852 = scalar_lea.sflag [#allocation9], %s851
        %s853 = sand.u32 %s156, 1
        %s854 = smul.addr %s853, 12
        %s855 = scalar_lea.vmem [#allocation10], %s854
        // Predicated region
        $region37: #{tpu_custom_call.1} parent=27 // pred_check
          %p856 = pneg %p110
        $region38: #{tpu_custom_call.1} parent=27 // pred_check_branch
          %858 = sbr.rel (%p856) target = $region40
        $region39: #{tpu_custom_call.1} parent=27 // pred_region
          %s859 = smul.u32 3, %s31
          %s861 = ssub.s32 48, 48
          %862 = vsyncadd %s842, %s861
          %s863 = smul.addr %s30, 3
          %s864 = sadd.s32 %s859, %s863
          %s865 = smul.addr %s864, 16
          %s866 = scalar_lea.hbm %s2, %s865
          %s868 = sshll.u32 %s845, 4
          %s869 = int_to_ptr.vmem [resolvable:$true] %s868
          %871 = dma.vmem_to_hbm [thread:$0]  %s869, 48, %s866, %s842
        $region40: #{tpu_custom_call.1} parent=27 // pred_fallthru
          _
        // Predicated region
        $region41: #{tpu_custom_call.1} parent=27 // pred_check
          %p872 = pneg %p138
        $region42: #{tpu_custom_call.1} parent=27 // pred_check_branch
          %874 = sbr.rel (%p872) target = $region44
        $region43: #{tpu_custom_call.1} parent=27 // pred_region
          %s875 = smul.u32 3, %s31
          %s877 = ssub.s32 48, 48
          %878 = vsyncadd %s847, %s877
          %s879 = smul.addr %s30, 3
          %s880 = sadd.s32 %s875, %s879
          %s881 = smul.addr %s880, 16
          %s882 = scalar_lea.hbm %s3, %s881
          %s884 = sshll.u32 %s850, 4
          %s885 = int_to_ptr.vmem [resolvable:$true] %s884
          %887 = dma.vmem_to_hbm [thread:$0]  %s885, 48, %s882, %s847
        $region44: #{tpu_custom_call.1} parent=27 // pred_fallthru
          _
        // Predicated region
        $region45: #{tpu_custom_call.1} parent=27 // pred_check
          %p888 = pneg %p166
        $region46: #{tpu_custom_call.1} parent=27 // pred_check_branch
          %890 = sbr.rel (%p888) target = $region48
        $region47: #{tpu_custom_call.1} parent=27 // pred_region
          %s891 = smul.u32 3, %s31
          %s893 = ssub.s32 192, 192
          %894 = vsyncadd %s852, %s893
          %s895 = smul.addr %s30, 3
          %s896 = sadd.s32 %s891, %s895
          %s897 = smul.addr %s896, 64
          %s898 = scalar_lea.hbm %s4, %s897
          %s900 = sshll.u32 %s855, 4
          %s901 = int_to_ptr.vmem [resolvable:$true] %s900
          %903 = dma.vmem_to_hbm [thread:$0]  %s901, 192, %s898, %s852
        $region48: #{tpu_custom_call.1} parent=27 // pred_fallthru
          _
      $region28: #{tpu_custom_call.1} parent=5 // pred_fallthru
        _
      %p904 = scmp.le.s32.totalorder 2, %s21
      // Predicated region
      $region49: #{tpu_custom_call.1} parent=5 // pred_check
        %p905 = pneg %p904
      $region50: #{tpu_custom_call.1} parent=5 // pred_check_branch
        %907 = sbr.rel (%p905) target = $region52
      $region51: #{tpu_custom_call.1} parent=5 // pred_region
        %s908 = ssub.s32 %s21, 2
        // Predicated region
        $region53: #{tpu_custom_call.1} parent=51 // pred_check
          %p909 = pneg %p116
        $region54: #{tpu_custom_call.1} parent=51 // pred_check_branch
          %911 = sbr.rel (%p909) target = $region56
        $region55: #{tpu_custom_call.1} parent=51 // pred_region
          %s912 = sand.u32 %s101, 1
          %s913 = scalar_lea.sflag [#allocation4], %s912
          %s914 = sand.u32 %s101, 1
          %s915 = smul.addr %s914, 3
          %s916 = scalar_lea.vmem [#allocation7], %s915
          %917 = dma.done %s913, 48
        $region56: #{tpu_custom_call.1} parent=51 // pred_fallthru
          _
        // Predicated region
        $region57: #{tpu_custom_call.1} parent=51 // pred_check
          %p918 = pneg %p144
        $region58: #{tpu_custom_call.1} parent=51 // pred_check_branch
          %920 = sbr.rel (%p918) target = $region60
        $region59: #{tpu_custom_call.1} parent=51 // pred_region
          %s921 = sand.u32 %s27, 1
          %s922 = scalar_lea.sflag [#allocation9], %s921
          %s923 = sand.u32 %s129, 1
          %s924 = smul.addr %s923, 3
          %s925 = scalar_lea.vmem [#allocation8], %s924
          %926 = dma.done %s922, 48
        $region60: #{tpu_custom_call.1} parent=51 // pred_fallthru
          _
        // Predicated region
        $region61: #{tpu_custom_call.1} parent=51 // pred_check
          %p927 = pneg %p172
        $region62: #{tpu_custom_call.1} parent=51 // pred_check_branch
          %929 = sbr.rel (%p927) target = $region64
        $region63: #{tpu_custom_call.1} parent=51 // pred_region
          %s930 = sand.u32 %s27, 1
          %s931 = scalar_lea.sflag [#allocation9], %s930
          %s932 = sand.u32 %s157, 1
          %s933 = smul.addr %s932, 12
          %s934 = scalar_lea.vmem [#allocation10], %s933
          %935 = dma.done %s931, 192
        $region64: #{tpu_custom_call.1} parent=51 // pred_fallthru
          _
      $region52: #{tpu_custom_call.1} parent=5 // pred_fallthru
        _
    $region6: #{tpu_custom_call.1} parent=1 // loop_footer
      %s25 = sadd.s32 1, %s21
    $region7: #{tpu_custom_call.1} parent=1 // loop_footer_branch
      %20 = sbr.rel target = $region3
    $region8: #{tpu_custom_call.1} parent=1 // loop_exit
      _
    %936 = vsyncpa [#allocation3], 1
    %s937 = scalar_lea.sflag [#allocation3], 1
    %938 = vsyncpa %s937, 1
    %939 = vsyncpa [#allocation6], 1
    %s940 = scalar_lea.sflag [#allocation6], 1
    %941 = vsyncpa %s940, 1
    %942 = vsyncpa [#allocation4], 1
    %s943 = scalar_lea.sflag [#allocation4], 1
    %944 = vsyncpa %s943, 1
    %945 = vsyncpa [#allocation9], 1
    %s946 = scalar_lea.sflag [#allocation9], 1
    %947 = vsyncpa %s946, 1

</llo_original>
